<compile_context>
chip_gen: v6e
topology: v6e:2x2x1
jax: 0.10.0
libtpu: 0.0.40
codegen_flags: <defaults>
</compile_context>

<pallas_src>
import functools

import jax
import jax.numpy as jnp
from jax.experimental import pallas as pl
from jax.experimental.pallas import tpu as pltpu


def _conv1x1_kernel(x_ref, w_ref, b_ref, o_ref, *, use_mxu):
    # x_ref: (C_in, T)   w_ref: (C_out, C_in)   b_ref: (C_out, 1)   o_ref: (C_out, T)
    x = x_ref[...].astype(jnp.float32)
    w = w_ref[...].astype(jnp.float32)
    b = b_ref[...].astype(jnp.float32)

    if use_mxu:
        y = jnp.dot(w, x, preferred_element_type=jnp.float32)
    else:
        # Tiny contraction (C_in small): C_in VPU FMAs per output vreg,
        # avoids MXU push/pop latency for a <1%-utilized systolic array.
        c_in = x_ref.shape[0]
        y = w[:, 0:1] * x[0:1, :]                     # (C_out, T)
        for ci in range(1, c_in):                     # static unroll
            y = y + w[:, ci:ci + 1] * x[ci:ci + 1, :]

    y = y + b                                          # (C_out, T) + (C_out, 1)
    o_ref[...] = jax.nn.sigmoid(y).astype(o_ref.dtype)


@functools.partial(jax.jit, static_argnames=("hw_tile_cap",))
def conv1x1_sigmoid(x_nchw, weight, bias, *, hw_tile_cap=8 * 1024):
    """Equivalent of Conv1x1.forward: sigmoid(Conv2d(k=1)(x)).

    x_nchw: (N, C_in, H, W)  weight: (C_out, C_in, 1, 1)  bias: (C_out,)
    returns: (N, C_out, H, W)
    """
    N, C_in, H, W = x_nchw.shape
    C_out = weight.shape[0]
    HW = H * W

    # Free reshapes — no transposes, no extra HBM traffic.
    x3 = x_nchw.reshape(N, C_in, HW)                   # (N, C_in, HW)
    w_mat = weight.reshape(C_out, C_in)                # (C_out, C_in)
    b_col = bias.reshape(C_out, 1)                     # (C_out, 1)

    # Lane-axis tile: full HW if it fits the cap, otherwise a 128-multiple cap
    # with a masked tail (cdiv grid) — no divisibility assert needed.
    if HW <= hw_tile_cap:
        hw_tile = HW                                   # full-dim block always legal
    else:
        hw_tile = hw_tile_cap                          # multiple of 128
    grid = (N, pl.cdiv(HW, hw_tile))

    # TODO(synk): very large C_in/C_out would also need channel tiling in VMEM.
    use_mxu = C_in > 8

    kernel = functools.partial(_conv1x1_kernel, use_mxu=use_mxu)

    itemsize = x_nchw.dtype.itemsize
    cost = pl.CostEstimate(
        flops=2 * N * HW * C_in * C_out,
        transcendentals=N * HW * C_out,                # exp in sigmoid
        bytes_accessed=(N * C_in * HW + C_out * C_in + C_out
                        + N * C_out * HW) * itemsize,
    )

    out3 = pl.pallas_call(
        kernel,
        out_shape=jax.ShapeDtypeStruct((N, C_out, HW), x_nchw.dtype),
        grid_spec=pltpu.PrefetchScalarGridSpec(
            num_scalar_prefetch=0,
            grid=grid,
            in_specs=[
                # activation tile, batch dim squeezed out of the kernel view
                pl.BlockSpec((None, C_in, hw_tile), lambda n, j: (n, 0, j)),
                # full weight / bias (tiny, constant across the grid)
                pl.BlockSpec((C_out, C_in), lambda n, j: (0, 0)),
                pl.BlockSpec((C_out, 1), lambda n, j: (0, 0)),
            ],
            out_specs=pl.BlockSpec((None, C_out, hw_tile), lambda n, j: (n, 0, j)),
        ),
        compiler_params=pltpu.CompilerParams(
            dimension_semantics=("parallel", "parallel"),
            vmem_limit_bytes=32 * 1024 * 1024,
        ),
        cost_estimate=cost,
    )(x3, w_mat, b_col)

    return out3.reshape(N, C_out, H, W)


if __name__ == "__main__":
    key = jax.random.PRNGKey(0)
    k_x, k_w, k_b = jax.random.split(key, 3)

    N, C_in, C_out, H, W = 2, 4, 8, 16, 16

    x = jax.random.normal(k_x, (N, C_in, H, W), dtype=jnp.float32)
    # Deterministic parameter init (PyTorch Conv2d shapes: (C_out, C_in, 1, 1), (C_out,))
    bound = 1.0 / (C_in ** 0.5)
    weight = jax.random.uniform(k_w, (C_out, C_in, 1, 1), jnp.float32,
                                minval=-bound, maxval=bound)
    bias = jax.random.uniform(k_b, (C_out,), jnp.float32,
                              minval=-bound, maxval=bound)

    out = conv1x1_sigmoid(x, weight, bias)
    out = jax.block_until_ready(out)

    # Reference check in plain JAX (same math path outside Pallas).
    ref = jax.nn.sigmoid(
        jnp.einsum("nchw,oc->nohw", x, weight.reshape(C_out, C_in))
        + bias[None, :, None, None])
    assert out.shape == (N, C_out, H, W)
    assert jnp.allclose(out, ref, atol=1e-5, rtol=1e-5)

    print("KERNEL_OK")
</pallas_src>

<mosaic_0001>
module attributes {stable_mosaic.version = 11 : i64} {
  func.func @_conv1x1_kernel(%arg0: i32, %arg1: i32, %arg2: memref<1x4x256xf32, #tpu.memory_space<vmem>>, %arg3: memref<8x4xf32, #tpu.memory_space<vmem>>, %arg4: memref<8x1xf32, #tpu.memory_space<vmem>>, %arg5: memref<1x8x256xf32, #tpu.memory_space<vmem>>) attributes {dimension_semantics = [#tpu.dimension_semantics<parallel>, #tpu.dimension_semantics<parallel>], iteration_bounds = array<i64: 2, 1>, scalar_prefetch = 0 : i64, scratch_operands = 0 : i64, tpu.core_type = #tpu.core_type<tc>, window_params = [{transform_indices = @transform_0, window_bounds = array<i64: 1, 4, 256>}, {pipeline_mode = #tpu.pipeline_mode<synchronous>, transform_indices = @transform_1, window_bounds = array<i64: 8, 4>}, {pipeline_mode = #tpu.pipeline_mode<synchronous>, transform_indices = @transform_2, window_bounds = array<i64: 8, 1>}, {transform_indices = @transform_3, window_bounds = array<i64: 1, 8, 256>}]} {
    %c0 = arith.constant 0 : index
    %c0_0 = arith.constant 0 : index
    %c0_1 = arith.constant 0 : index
    %0 = vector.load %arg2[%c0, %c0_0, %c0_1] : memref<1x4x256xf32, #tpu.memory_space<vmem>>, vector<1x4x256xf32>
    %1 = vector.shape_cast %0 : vector<1x4x256xf32> to vector<4x256xf32>
    %c0_2 = arith.constant 0 : index
    %c0_3 = arith.constant 0 : index
    %2 = vector.load %arg3[%c0_2, %c0_3] : memref<8x4xf32, #tpu.memory_space<vmem>>, vector<8x4xf32>
    %c0_4 = arith.constant 0 : index
    %c0_5 = arith.constant 0 : index
    %3 = vector.load %arg4[%c0_4, %c0_5] : memref<8x1xf32, #tpu.memory_space<vmem>>, vector<8x1xf32>
    %4 = vector.extract_strided_slice %2 {offsets = [0, 0], sizes = [8, 1], strides = [1, 1]} : vector<8x4xf32> to vector<8x1xf32>
    %5 = vector.extract_strided_slice %1 {offsets = [0, 0], sizes = [1, 256], strides = [1, 1]} : vector<4x256xf32> to vector<1x256xf32>
    %6 = vector.broadcast %4 : vector<8x1xf32> to vector<8x256xf32>
    %7 = vector.broadcast %5 : vector<1x256xf32> to vector<8x256xf32>
    %8 = arith.mulf %6, %7 : vector<8x256xf32>
    %9 = vector.extract_strided_slice %2 {offsets = [0, 1], sizes = [8, 1], strides = [1, 1]} : vector<8x4xf32> to vector<8x1xf32>
    %10 = vector.extract_strided_slice %1 {offsets = [1, 0], sizes = [1, 256], strides = [1, 1]} : vector<4x256xf32> to vector<1x256xf32>
    %11 = vector.broadcast %9 : vector<8x1xf32> to vector<8x256xf32>
    %12 = vector.broadcast %10 : vector<1x256xf32> to vector<8x256xf32>
    %13 = arith.mulf %11, %12 : vector<8x256xf32>
    %14 = arith.addf %8, %13 : vector<8x256xf32>
    %15 = vector.extract_strided_slice %2 {offsets = [0, 2], sizes = [8, 1], strides = [1, 1]} : vector<8x4xf32> to vector<8x1xf32>
    %16 = vector.extract_strided_slice %1 {offsets = [2, 0], sizes = [1, 256], strides = [1, 1]} : vector<4x256xf32> to vector<1x256xf32>
    %17 = vector.broadcast %15 : vector<8x1xf32> to vector<8x256xf32>
    %18 = vector.broadcast %16 : vector<1x256xf32> to vector<8x256xf32>
    %19 = arith.mulf %17, %18 : vector<8x256xf32>
    %20 = arith.addf %14, %19 : vector<8x256xf32>
    %21 = vector.extract_strided_slice %2 {offsets = [0, 3], sizes = [8, 1], strides = [1, 1]} : vector<8x4xf32> to vector<8x1xf32>
    %22 = vector.extract_strided_slice %1 {offsets = [3, 0], sizes = [1, 256], strides = [1, 1]} : vector<4x256xf32> to vector<1x256xf32>
    %23 = vector.broadcast %21 : vector<8x1xf32> to vector<8x256xf32>
    %24 = vector.broadcast %22 : vector<1x256xf32> to vector<8x256xf32>
    %25 = arith.mulf %23, %24 : vector<8x256xf32>
    %26 = arith.addf %20, %25 : vector<8x256xf32>
    %27 = vector.broadcast %3 : vector<8x1xf32> to vector<8x256xf32>
    %28 = arith.addf %26, %27 : vector<8x256xf32>
    %29 = arith.negf %28 : vector<8x256xf32>
    %30 = math.exp %29 : vector<8x256xf32>
    %cst = arith.constant 1.000000e+00 : f32
    %31 = vector.broadcast %cst : f32 to vector<8x256xf32>
    %32 = arith.addf %31, %30 : vector<8x256xf32>
    %33 = arith.divf %31, %32 : vector<8x256xf32>
    %c0_6 = arith.constant 0 : index
    %c0_7 = arith.constant 0 : index
    %c0_8 = arith.constant 0 : index
    %34 = vector.load %arg5[%c0_6, %c0_7, %c0_8] : memref<1x8x256xf32, #tpu.memory_space<vmem>>, vector<1x8x256xf32>
    %35 = vector.shape_cast %34 : vector<1x8x256xf32> to vector<8x256xf32>
    %36 = vector.shape_cast %33 : vector<8x256xf32> to vector<1x8x256xf32>
    tpu.vector_store %arg5[%c0_6, %c0_7, %c0_8], %36 {strides = array<i32>} : memref<1x8x256xf32, #tpu.memory_space<vmem>>, vector<1x8x256xf32>,
    return
  }
  func.func @transform_0(%arg0: i32, %arg1: i32) -> (i32, i32, i32) {
    %c0_i32 = arith.constant 0 : i32
    %c0_i32_0 = arith.constant 0 : i32
    return %arg0, %c0_i32, %arg1 : i32, i32, i32
  }
  func.func @transform_1(%arg0: i32, %arg1: i32) -> (i32, i32) {
    %c0_i32 = arith.constant 0 : i32
    %c0_i32_0 = arith.constant 0 : i32
    %c0_i32_1 = arith.constant 0 : i32
    return %c0_i32, %c0_i32_0 : i32, i32
  }
  func.func @transform_2(%arg0: i32, %arg1: i32) -> (i32, i32) {
    %c0_i32 = arith.constant 0 : i32
    %c0_i32_0 = arith.constant 0 : i32
    %c0_i32_1 = arith.constant 0 : i32
    return %c0_i32, %c0_i32_0 : i32, i32
  }
  func.func @transform_3(%arg0: i32, %arg1: i32) -> (i32, i32, i32) {
    %c0_i32 = arith.constant 0 : i32
    %c0_i32_0 = arith.constant 0 : i32
    return %arg0, %c0_i32, %arg1 : i32, i32, i32
  }
}

</mosaic_0001>

<llo_original>
// kernel: conv1x1_sigmoid.1
$region0: #{conv1x1_sigmoid.1}
  #allocation0 [shape = 'u32[]', space=smem, size = 0x4, offset = 0x4, fixed_abs, tag = 'smem constant byte address 0x4 - core index']
  #allocation1 [shape = 'u32[144,128]{1,0:T(1,128)}', space=vmem, size = 0x12000, scoped, tag = 'internal scratch']
  %s0 = inlined_call_operand.vmem [shape: f32[2,4,256], index: 0, kind: input, shape index: {}]
  %s1 = inlined_call_operand.vmem [shape: f32[8,4], index: 1, kind: input, shape index: {}]
  %s2 = inlined_call_operand.vmem [shape: f32[8,1], index: 2, kind: input, shape index: {}]
  %s3 = inlined_call_operand.vmem [shape: f32[2,8,256], index: 3, kind: output, shape index: {}]
  %s4 = sld [smem:[#allocation0]]
  $region45: #{conv1x1_sigmoid.1} parent=0
    _
  %s6 = ssub.s32 1, %s4
  %s7 = scalar_select 0, %s6, %s4
  loop: start=0, step=1, limit=4
  $region2: #{conv1x1_sigmoid.1} parent=0 // loop_pre_header
    _
  $region3: #{conv1x1_sigmoid.1} parent=0 // loop_header
    %s9 = sphi 0, %s13
    %p10 = scmp.ge.s32.totalorder %s9, 4
    %s16 = sphi 0, %s28
    %s17 = sphi 0, %s24
    %s18 = sphi 0, %s16
    %s19 = sphi 0, %s17
    %s20 = sphi 0, %s18
    %s21 = sphi 0, %s19
    %s33 = sphi 0, %s35
    %s36 = sphi 0, %s33
    %s37 = sphi 0, %s36
    %s53 = sphi 0, %s37
    %s57 = sphi 0, %s57
    %s59 = sphi 0, %s57
    %s60 = sphi 0, %s59
    %s74 = sphi 0, %s60
    %s78 = sphi 0, %s78
    %s80 = sphi 0, %s78
    %s81 = sphi 0, %s80
    %s95 = sphi 0, %s81
    %s103 = sphi 0, %s105
    %s106 = sphi 0, %s103
    %s107 = sphi 0, %s106
    %s123 = sphi 0, %s107
  $region4: #{conv1x1_sigmoid.1} parent=0 // loop_header_branch
    %12 = sbr.rel (%p10) target = $region8
  $region5: #{conv1x1_sigmoid.1} parent=0 // loop_body
    %s14 = ssub.s32 %s9, 1
    %s15 = ssub.s32 %s9, 2
    %s22 = sadd.s32 1, %s17
    %p23 = scmp.ge.s32.totalorder %s22, 1
    %s24 = scalar_select %p23, 0, %s22
    %s25 = sadd.s32 1, %s16
    %s26 = scalar_select %p23, %s25, %s16
    %p27 = scmp.ge.s32.totalorder %s26, 2
    %s28 = scalar_select %p27, 0, %s26
    %s29 = ssub.s32 %s16, %s28
    %s30 = ssub.s32 %s17, %s24
    %s31 = sor.u32 %s29, %s30
    %p32 = scmp.eq.s32.totalorder %s31, 0
    %s34 = sadd.s32 %s33, 1
    %s35 = scalar_select %p32, %s33, %s34
    %p38 = pneg %p32
    %p39 = scmp.eq.s32.totalorder %s9, 1
    %p40 = por %p38, %p39
    %p41 = scmp.ne.s32.totalorder %s33, %s36
    %p42 = scmp.eq.s32.totalorder %s9, 0
    %p43 = por %p41, %p42
    %p44 = scmp.ne.s32.totalorder %s33, %s36
    %p45 = scmp.eq.s32.totalorder %s14, 1
    %p46 = por %p44, %p45
    %p47 = scmp.ne.s32.totalorder %s36, %s37
    %p48 = scmp.eq.s32.totalorder %s14, 0
    %p49 = por %p47, %p48
    %p50 = scmp.ne.s32.totalorder %s36, %s37
    %p51 = scmp.eq.s32.totalorder %s15, 1
    %p52 = por %p50, %p51
    %p54 = scmp.ne.s32.totalorder %s37, %s53
    %p55 = scmp.eq.s32.totalorder %s15, 0
    %p56 = por %p54, %p55
    %s58 = sadd.s32 %s57, 1
    %p61 = scmp.eq.s32.totalorder %s9, 1
    %p62 = scmp.ne.s32.totalorder %s57, %s59
    %p63 = scmp.eq.s32.totalorder %s9, 0
    %p64 = por %p62, %p63
    %p65 = scmp.ne.s32.totalorder %s57, %s59
    %p66 = scmp.eq.s32.totalorder %s14, 1
    %p67 = por %p65, %p66
    %p68 = scmp.ne.s32.totalorder %s59, %s60
    %p69 = scmp.eq.s32.totalorder %s14, 0
    %p70 = por %p68, %p69
    %p71 = scmp.ne.s32.totalorder %s59, %s60
    %p72 = scmp.eq.s32.totalorder %s15, 1
    %p73 = por %p71, %p72
    %p75 = scmp.ne.s32.totalorder %s60, %s74
    %p76 = scmp.eq.s32.totalorder %s15, 0
    %p77 = por %p75, %p76
    %s79 = sadd.s32 %s78, 1
    %p82 = scmp.eq.s32.totalorder %s9, 1
    %p83 = scmp.ne.s32.totalorder %s78, %s80
    %p84 = scmp.eq.s32.totalorder %s9, 0
    %p85 = por %p83, %p84
    %p86 = scmp.ne.s32.totalorder %s78, %s80
    %p87 = scmp.eq.s32.totalorder %s14, 1
    %p88 = por %p86, %p87
    %p89 = scmp.ne.s32.totalorder %s80, %s81
    %p90 = scmp.eq.s32.totalorder %s14, 0
    %p91 = por %p89, %p90
    %p92 = scmp.ne.s32.totalorder %s80, %s81
    %p93 = scmp.eq.s32.totalorder %s15, 1
    %p94 = por %p92, %p93
    %p96 = scmp.ne.s32.totalorder %s81, %s95
    %p97 = scmp.eq.s32.totalorder %s15, 0
    %p98 = por %p96, %p97
    %s99 = ssub.s32 %s16, %s28
    %s100 = ssub.s32 %s17, %s24
    %s101 = sor.u32 %s99, %s100
    %p102 = scmp.eq.s32.totalorder %s101, 0
    %s104 = sadd.s32 %s103, 1
    %s105 = scalar_select %p102, %s103, %s104
    %p108 = pneg %p102
    %p109 = scmp.eq.s32.totalorder %s9, 1
    %p110 = por %p108, %p109
    %p111 = scmp.ne.s32.totalorder %s103, %s106
    %p112 = scmp.eq.s32.totalorder %s9, 0
    %p113 = por %p111, %p112
    %p114 = scmp.ne.s32.totalorder %s103, %s106
    %p115 = scmp.eq.s32.totalorder %s14, 1
    %p116 = por %p114, %p115
    %p117 = scmp.ne.s32.totalorder %s106, %s107
    %p118 = scmp.eq.s32.totalorder %s14, 0
    %p119 = por %p117, %p118
    %p120 = scmp.ne.s32.totalorder %s106, %s107
    %p121 = scmp.eq.s32.totalorder %s15, 1
    %p122 = por %p120, %p121
    %p124 = scmp.ne.s32.totalorder %s107, %s123
    %p125 = scmp.eq.s32.totalorder %s15, 0
    %p126 = por %p124, %p125
    %p127 = scmp.le.s32.totalorder 1, %s9
    %p128 = scmp.lt.s32.totalorder %s9, 3
    %p129 = pnand %p127, %p128
    %p130 = pneg %p129
    // Predicated region
    $region9: #{conv1x1_sigmoid.1} parent=5 // pred_check
      _
    $region10: #{conv1x1_sigmoid.1} parent=5 // pred_check_branch
      %132 = sbr.rel (%p129) target = $region12
    $region11: #{conv1x1_sigmoid.1} parent=5 // pred_region
      %s133 = ssub.s32 %s9, 1
      // Predicated region
      $region13: #{conv1x1_sigmoid.1} parent=11 // pred_check
        %p134 = pneg %p70
      $region14: #{conv1x1_sigmoid.1} parent=11 // pred_check_branch
        %136 = sbr.rel (%p134) target = $region16
      $region15: #{conv1x1_sigmoid.1} parent=11 // pred_region
        _
      $region16: #{conv1x1_sigmoid.1} parent=11 // pred_fallthru
        _
      // Predicated region
      $region17: #{conv1x1_sigmoid.1} parent=11 // pred_check
        %p137 = pneg %p91
      $region18: #{conv1x1_sigmoid.1} parent=11 // pred_check_branch
        %139 = sbr.rel (%p137) target = $region20
      $region19: #{conv1x1_sigmoid.1} parent=11 // pred_region
        _
      $region20: #{conv1x1_sigmoid.1} parent=11 // pred_fallthru
        _
    $region12: #{conv1x1_sigmoid.1} parent=5 // pred_fallthru
      _
    %p140 = scmp.lt.s32.totalorder %s9, 2
    // Predicated region
    $region21: #{conv1x1_sigmoid.1} parent=5 // pred_check
      %p141 = pneg %p140
    $region22: #{conv1x1_sigmoid.1} parent=5 // pred_check_branch
      %143 = sbr.rel (%p141) target = $region24
    $region23: #{conv1x1_sigmoid.1} parent=5 // pred_region
      // Predicated region
      $region25: #{conv1x1_sigmoid.1} parent=23 // pred_check
        %p144 = pneg %p43
      $region26: #{conv1x1_sigmoid.1} parent=23 // pred_check_branch
        %146 = sbr.rel (%p144) target = $region28
      $region27: #{conv1x1_sigmoid.1} parent=23 // pred_region
        %s147 = smul.u32 2, %s17
        %p148 = scmp.lt.s32.totalorder %s16, 1
        %s149 = scalar_select %p148, %s16, 1
        %p150 = scmp.lt.s32.totalorder %s147, 1
        %s151 = scalar_select %p150, %s147, 1
        %s152 = smul.addr %s149, 2
        %s153 = sadd.s32 %s151, %s152
        %s154 = smul.addr %s153, 4
        %s155 = scalar_lea.vmem %s0, %s154
        %s156 = smul.u32 2, %s17
      $region28: #{conv1x1_sigmoid.1} parent=23 // pred_fallthru
        _
    $region24: #{conv1x1_sigmoid.1} parent=5 // pred_fallthru
      _
    %p157 = scmp.le.s32.totalorder 1, %s9
    %p158 = scmp.lt.s32.totalorder %s9, 3
    %p159 = pnand %p157, %p158
    %p160 = pneg %p159
    // Predicated region
    $region29: #{conv1x1_sigmoid.1} parent=5 // pred_check
      _
    $region30: #{conv1x1_sigmoid.1} parent=5 // pred_check_branch
      %162 = sbr.rel (%p159) target = $region32
    $region31: #{conv1x1_sigmoid.1} parent=5 // pred_region
      %s163 = ssub.s32 %s9, 1
      %s164 = smul.u32 2, %s19
      %p165 = scmp.lt.s32.totalorder %s18, 1
      %s166 = scalar_select %p165, %s18, 1
      %p167 = scmp.lt.s32.totalorder %s164, 1
      %s168 = scalar_select %p167, %s164, 1
      %s169 = smul.addr %s166, 2
      %s170 = sadd.s32 %s168, %s169
      %s171 = smul.addr %s170, 4
      %s172 = scalar_lea.vmem %s0, %s171
      %p173 = pneg %p49
      %p174 = pneg %p46
      %p175 = pneg %p70
      %p176 = pneg %p67
      %p177 = pneg %p91
      %p178 = pneg %p88
      %p179 = pneg %p119
      %p180 = pneg %p116
      %s181 = smul.u32 2, %s19
      %p182 = scmp.lt.s32.totalorder %s18, 1
      %s183 = scalar_select %p182, %s18, 1
      %p184 = scmp.lt.s32.totalorder %s181, 1
      %s185 = scalar_select %p184, %s181, 1
      %s186 = smul.addr %s183, 2
      %s187 = sadd.s32 %s185, %s186
      %s188 = smul.addr %s187, 8
      %s189 = scalar_lea.vmem %s3, %s188
      %s190 = smul.u32 2, %s19
      %p191 = scmp.lt.s32.totalorder %s18, 1
      %s192 = scalar_select %p191, %s18, 1
      %p193 = scmp.lt.s32.totalorder %s190, 1
      %s194 = scalar_select %p193, %s190, 1
      %s195 = smul.addr %s192, 2
      %s196 = sadd.s32 %s194, %s195
      %s197 = smul.addr %s196, 4
      %s198 = scalar_lea.vmem %s0, %s197
      %s199 = smul.u32 2, %s19
      %s200 = smul.u32 2, %s19
      %p201 = scmp.lt.s32.totalorder %s18, 1
      %s202 = scalar_select %p201, %s18, 1
      %p203 = scmp.lt.s32.totalorder %s200, 1
      %s204 = scalar_select %p203, %s200, 1
      %s205 = smul.addr %s202, 2
      %s206 = sadd.s32 %s204, %s205
      %s207 = smul.addr %s206, 8
      %s208 = scalar_lea.vmem %s3, %s207
      %s209 = smul.u32 2, %s19
      %v210 = vld [vmem:[%s198] sm:$0xff]
      %v211 = vld [vmem:[%s1] sm:$0xff]
      %v212 = vld [vmem:[%s2] sm:$0xff]
      %214 = vset.pattern.permute.xlu0 0
      %215 = vperm.xlu0 %214, %v211
      %v216 = vpop.permute.xlu0 %215
      %v219 = vlaneseq
      %v220 = vshrl.u32 %v219, 7
      %v221 = vsub.s32 0, %v220
      %v222 = vrot.slane %v210, %v221
      %v223 = vlaneseq
      %v224 = vshrl.u32 %v223, 7
      %v225 = vsub.s32 4, %v224
      %v226 = vrot.slane %v210, %v225
      %v229 = vlaneseq
      %v230 = vshrl.u32 %v229, 7
      %v231 = vsub.s32 0, %v230
      %v232 = vrot.slane %v222, %v231
      %v233 = vlaneseq
      %v234 = vshrl.u32 %v233, 7
      %v235 = vsub.s32 0, %v234
      %v236 = vrot.slane %v226, %v235
      %v237 = vmul.f32 %v216, %v232
      %v238 = vmul.f32 %v216, %v236
      %239 = vset.pattern.permute.xlu0 1
      %240 = vperm.xlu0 %239, %v211
      %v241 = vpop.permute.xlu0 %240
      %v243 = vlaneseq
      %v244 = vshrl.u32 %v243, 7
      %v245 = vsub.s32 1, %v244
      %v246 = vrot.slane %v210, %v245
      %v247 = vlaneseq
      %v248 = vshrl.u32 %v247, 7
      %v249 = vsub.s32 5, %v248
      %v250 = vrot.slane %v210, %v249
      %v253 = vlaneseq
      %v254 = vshrl.u32 %v253, 7
      %v255 = vsub.s32 1, %v254
      %v256 = vrot.slane %v246, %v255
      %v257 = vlaneseq
      %v258 = vshrl.u32 %v257, 7
      %v259 = vsub.s32 1, %v258
      %v260 = vrot.slane %v250, %v259
      %v261 = vmul.f32 %v241, %v256
      %v262 = vmul.f32 %v241, %v260
      %v263 = vadd.f32 %v237, %v261
      %v264 = vadd.f32 %v238, %v262
      %265 = vset.pattern.permute.xlu0 2
      %266 = vperm.xlu0 %265, %v211
      %v267 = vpop.permute.xlu0 %266
      %v269 = vlaneseq
      %v270 = vshrl.u32 %v269, 7
      %v271 = vsub.s32 2, %v270
      %v272 = vrot.slane %v210, %v271
      %v273 = vlaneseq
      %v274 = vshrl.u32 %v273, 7
      %v275 = vsub.s32 6, %v274
      %v276 = vrot.slane %v210, %v275
      %v279 = vlaneseq
      %v280 = vshrl.u32 %v279, 7
      %v281 = vsub.s32 2, %v280
      %v282 = vrot.slane %v272, %v281
      %v283 = vlaneseq
      %v284 = vshrl.u32 %v283, 7
      %v285 = vsub.s32 2, %v284
      %v286 = vrot.slane %v276, %v285
      %v287 = vmul.f32 %v267, %v282
      %v288 = vmul.f32 %v267, %v286
      %v289 = vadd.f32 %v263, %v287
      %v290 = vadd.f32 %v264, %v288
      %291 = vset.pattern.permute.xlu0 3
      %292 = vperm.xlu0 %291, %v211
      %v293 = vpop.permute.xlu0 %292
      %v295 = vlaneseq
      %v296 = vshrl.u32 %v295, 7
      %v297 = vsub.s32 3, %v296
      %v298 = vrot.slane %v210, %v297
      %v299 = vlaneseq
      %v300 = vshrl.u32 %v299, 7
      %v301 = vsub.s32 7, %v300
      %v302 = vrot.slane %v210, %v301
      %v305 = vlaneseq
      %v306 = vshrl.u32 %v305, 7
      %v307 = vsub.s32 3, %v306
      %v308 = vrot.slane %v298, %v307
      %v309 = vlaneseq
      %v310 = vshrl.u32 %v309, 7
      %v311 = vsub.s32 3, %v310
      %v312 = vrot.slane %v302, %v311
      %v313 = vmul.f32 %v293, %v308
      %v314 = vmul.f32 %v293, %v312
      %v315 = vadd.f32 %v289, %v313
      %v316 = vadd.f32 %v290, %v314
      %318 = vset.pattern.permute.xlu0 0
      %319 = vperm.xlu0 %318, %v212
      %v320 = vpop.permute.xlu0 %319
      %v322 = vadd.f32 %v315, %v320
      %v323 = vadd.f32 %v316, %v320
      %v324 = vxor.u32 %v322, 2147483648
      %v325 = vxor.u32 %v323, 2147483648
      %v326 = vmul.f32 %v324, 1.442695
      %v327 = vpow.pop %v326
      %v328 = vmul.f32 %v325, 1.442695
      %v329 = vpow.pop %v328
      %v330 = vadd.f32 %v327, 1.0
      %v331 = vadd.f32 %v329, 1.0
      %v332 = vrcp.pop %v330
      %v333 = vmul.f32 1.0, %v332
      %v334 = vrcp.pop %v331
      %v335 = vmul.f32 1.0, %v334
      %336 = vst [vmem:[%s208] sm:$0xff] %v333
      %337 = vst [vmem:[%s208 + $0x8] sm:$0xff] %v335
      %s338 = smul.u32 2, %s19
      %p339 = scmp.lt.s32.totalorder %s18, 1
      %s340 = scalar_select %p339, %s18, 1
      %p341 = scmp.lt.s32.totalorder %s338, 1
      %s342 = scalar_select %p341, %s338, 1
      %s343 = smul.addr %s340, 2
      %s344 = sadd.s32 %s342, %s343
      %s345 = smul.addr %s344, 8
      %s346 = scalar_lea.vmem %s3, %s345
      // Predicated region
      $region33: #{conv1x1_sigmoid.1} parent=31 // pred_check
        %p347 = pneg %p116
      $region34: #{conv1x1_sigmoid.1} parent=31 // pred_check_branch
        %349 = sbr.rel (%p347) target = $region36
      $region35: #{conv1x1_sigmoid.1} parent=31 // pred_region
        %s350 = smul.u32 2, %s19
      $region36: #{conv1x1_sigmoid.1} parent=31 // pred_fallthru
        _
    $region32: #{conv1x1_sigmoid.1} parent=5 // pred_fallthru
      _
    %p351 = scmp.le.s32.totalorder 2, %s9
    // Predicated region
    $region37: #{conv1x1_sigmoid.1} parent=5 // pred_check
      %p352 = pneg %p351
    $region38: #{conv1x1_sigmoid.1} parent=5 // pred_check_branch
      %354 = sbr.rel (%p352) target = $region40
    $region39: #{conv1x1_sigmoid.1} parent=5 // pred_region
      %s355 = ssub.s32 %s9, 2
      // Predicated region
      $region41: #{conv1x1_sigmoid.1} parent=39 // pred_check
        %p356 = pneg %p122
      $region42: #{conv1x1_sigmoid.1} parent=39 // pred_check_branch
        %358 = sbr.rel (%p356) target = $region44
      $region43: #{conv1x1_sigmoid.1} parent=39 // pred_region
        %s359 = smul.u32 2, %s21
        %p360 = scmp.lt.s32.totalorder %s20, 1
        %s361 = scalar_select %p360, %s20, 1
        %p362 = scmp.lt.s32.totalorder %s359, 1
        %s363 = scalar_select %p362, %s359, 1
        %s364 = smul.addr %s361, 2
        %s365 = sadd.s32 %s363, %s364
        %s366 = smul.addr %s365, 8
        %s367 = scalar_lea.vmem %s3, %s366
      $region44: #{conv1x1_sigmoid.1} parent=39 // pred_fallthru
        _
    $region40: #{conv1x1_sigmoid.1} parent=5 // pred_fallthru
      _
  $region6: #{conv1x1_sigmoid.1} parent=0 // loop_footer
    %s13 = sadd.s32 1, %s9
  $region7: #{conv1x1_sigmoid.1} parent=0 // loop_footer_branch
    %8 = sbr.rel target = $region3
  $region8: #{conv1x1_sigmoid.1} parent=0 // loop_exit
    _

</llo_original>
